<compile_context>
chip_gen: v6e
topology: v6e:2x2x1
jax: 0.10.0
libtpu: 0.0.40
codegen_flags: <defaults>
</compile_context>

<pallas_src>
import jax
import jax.numpy as jnp
from jax.experimental import pallas as pl
from jax.experimental.pallas import tpu as pltpu

LANE = 128


def _ceil_mult(x, m):
    return (x + m - 1) // m * m


def _vmem_spec():
    return pl.BlockSpec(memory_space=pltpu.MemorySpace.VMEM)


# ---------------------------------------------------------------------------
# Plain-JAX glue: im2col patches grouped by pooling-window offset
# ---------------------------------------------------------------------------
def build_pool_patches(x, k, s, p):
    """x: (N,H,W,C) -> ((p*p, N*Hp*Wp, k*k*C) patches, Hp, Wp).

    Feature order along the last axis is [di, dj, c] (matches the flattened
    conv-weight layout).  Group g = a*p + c_off is pooling-window offset
    (a, c_off); rows within a group are ordered (n, hp, wp)."""
    N, H, W, C = x.shape
    Ho = (H - k) // s + 1
    Wo = (W - k) // s + 1
    Hp, Wp = Ho // p, Wo // p
    cols = []
    for di in range(k):
        for dj in range(k):
            cols.append(x[:, di:di + (Ho - 1) * s + 1:s,
                          dj:dj + (Wo - 1) * s + 1:s, :])        # (N,Ho,Wo,C)
    feat = jnp.concatenate(cols, axis=-1)                        # (N,Ho,Wo,k*k*C)
    feat = feat[:, :Hp * p, :Wp * p, :]                          # floor-mode pool crop
    K = k * k * C
    feat = feat.reshape(N, Hp, p, Wp, p, K)
    feat = jnp.transpose(feat, (2, 4, 0, 1, 3, 5))               # (p,p,N,Hp,Wp,K)
    return feat.reshape(p * p, N * Hp * Wp, K), Hp, Wp


# ---------------------------------------------------------------------------
# Gridded fused Conv2d (im2col GEMM) + MaxPool + bias + ReLU kernel
# ---------------------------------------------------------------------------
def make_conv_pool_kernel(pp, tm):
    def kernel(p_ref, w_ref, b_ref, o_ref):
        # p_ref: (pp*tm, K) bf16  -- pool-offset-major row groups of one M tile
        # w_ref: (K, Cp) bf16; b_ref: (1, Cp) f32; o_ref: (tm, Cp) bf16
        y = jnp.dot(p_ref[...], w_ref[...],
                    preferred_element_type=jnp.float32)          # one tall GEMM
        acc = y[0:tm]
        for g in range(1, pp):                                   # max-pool reduce
            acc = jnp.maximum(acc, y[g * tm:(g + 1) * tm])
        o_ref[...] = jnp.maximum(acc + b_ref[...], 0.0).astype(o_ref.dtype)
    return kernel


def conv_relu_pool(x_nhwc, w_pad, b_pad, cout, k, s, p):
    """One Conv2d+ReLU+MaxPool stage.  Returns (N, Hp, Wp, cout) bf16."""
    N = x_nhwc.shape[0]
    patches, Hp, Wp = build_pool_patches(x_nhwc, k, s, p)        # (pp, M, K)
    pp, M, K = patches.shape
    Cp = w_pad.shape[1]

    TM = 256 if M >= 256 else _ceil_mult(M, 16)                  # tall M tiles
    grid_m = -(-M // TM)
    M_pad = grid_m * TM

    patches = patches.astype(jnp.bfloat16)
    if M_pad != M:
        patches = jnp.pad(patches, ((0, 0), (0, M_pad - M), (0, 0)))
    # Re-order rows to (M-tile, pool-offset, row-in-tile) so each grid step
    # reads one contiguous (pp*TM, K) slab.
    slab = patches.reshape(pp, grid_m, TM, K).transpose(1, 0, 2, 3)
    slab = slab.reshape(grid_m * pp * TM, K)

    out = pl.pallas_call(
        make_conv_pool_kernel(pp, TM),
        out_shape=jax.ShapeDtypeStruct((M_pad, Cp), jnp.bfloat16),
        grid=(grid_m,),
        in_specs=[pl.BlockSpec((pp * TM, K), lambda i: (i, 0)),
                  pl.BlockSpec((K, Cp), lambda i: (0, 0)),
                  pl.BlockSpec((1, Cp), lambda i: (0, 0))],
        out_specs=pl.BlockSpec((TM, Cp), lambda i: (i, 0)),
        compiler_params=pltpu.CompilerParams(
            dimension_semantics=("parallel",),
            vmem_limit_bytes=32 * 1024 * 1024),
    )(slab, w_pad, b_pad)
    return out[:M, :cout].reshape(N, Hp, Wp, cout)


# ---------------------------------------------------------------------------
# Fused tail: last conv stage + CenterCrop(1) + Linear/ReLU stack
# ---------------------------------------------------------------------------
def make_tail_kernel(pp, tm, n_linear):
    def kernel(p_ref, wc_ref, bc_ref, sel_ref, *refs):
        o_ref = refs[-1]
        lin = refs[:-1]
        y = jnp.dot(p_ref[...], wc_ref[...],
                    preferred_element_type=jnp.float32)          # (pp*tm, Cp)
        acc = y[0:tm]
        for g in range(1, pp):
            acc = jnp.maximum(acc, y[g * tm:(g + 1) * tm])
        fmap = jnp.maximum(acc + bc_ref[...], 0.0)               # (tm, Cp) f32
        # CenterCrop(1) as a one-hot row-selection matmul (no sublane gather).
        h = jnp.dot(sel_ref[...], fmap, preferred_element_type=jnp.float32)
        for i in range(n_linear):                                # Linear + ReLU
            w = lin[2 * i][...]
            b = lin[2 * i + 1][...]
            h = jnp.dot(h.astype(w.dtype), w,
                        preferred_element_type=jnp.float32)
            h = jnp.maximum(h + b, 0.0)
        o_ref[...] = h.astype(o_ref.dtype)
    return kernel


def conv_tail_mlp(x_nhwc, w_pad, b_pad, k, s, p, lin_ws, lin_bs):
    N = x_nhwc.shape[0]
    patches, Hp, Wp = build_pool_patches(x_nhwc, k, s, p)        # (pp, M, K)
    pp, M, K = patches.shape

    TM = _ceil_mult(M, 8)
    patches = patches.astype(jnp.bfloat16)
    if TM != M:
        patches = jnp.pad(patches, ((0, 0), (0, TM - M), (0, 0)))
    slab = patches.reshape(pp * TM, K)

    # torchvision CenterCrop(1): top-left index of the center pixel.
    ch = int(round((Hp - 1) / 2.0))
    cw = int(round((Wp - 1) / 2.0))
    rows = jnp.asarray([n * Hp * Wp + ch * Wp + cw for n in range(N)])
    sel = jax.nn.one_hot(rows, TM, dtype=jnp.float32)            # (N, TM)

    out_cp = lin_ws[-1].shape[1]
    args = [slab, w_pad, b_pad, sel]
    for w, b in zip(lin_ws, lin_bs):
        args += [w, b]
    return pl.pallas_call(
        make_tail_kernel(pp, TM, len(lin_ws)),
        out_shape=jax.ShapeDtypeStruct((N, out_cp), jnp.float32),
        in_specs=[_vmem_spec()] * len(args),
        out_specs=_vmem_spec(),
    )(*args)


# ---------------------------------------------------------------------------
# Parameter init (deterministic, synthetic) + full forward
# ---------------------------------------------------------------------------
def init_params(key, in_channels, out_channels, kernel_sizes,
                n_linear_layers, target_size):
    params = {"conv": [], "linear": []}
    cin = in_channels
    for k in kernel_sizes:
        key, k1, k2 = jax.random.split(key, 3)
        fan_in = cin * k * k
        w = jax.random.normal(k1, (k, k, cin, out_channels), jnp.float32) / jnp.sqrt(fan_in)
        b = jax.random.normal(k2, (1, out_channels), jnp.float32) * 0.01
        params["conv"].append((w.reshape(k * k * cin, out_channels), b))
        cin = out_channels
    lin_in = out_channels
    lin_outs = [out_channels] * (n_linear_layers - 1) + [target_size]
    for o in lin_outs:
        key, k1, k2 = jax.random.split(key, 3)
        w = jax.random.normal(k1, (lin_in, o), jnp.float32) / jnp.sqrt(lin_in)
        b = jax.random.normal(k2, (1, o), jnp.float32) * 0.01
        params["linear"].append((w, b))
        lin_in = o
    return params


def _pad_lanes(a, cols):
    return jnp.pad(a, ((0, 0), (0, cols - a.shape[1])))


def spatial_block_forward(x_nchw, params, kernel_sizes, strides, pooling_sizes,
                          target_size):
    x = jnp.transpose(x_nchw, (0, 2, 3, 1))                      # NCHW -> NHWC

    # Lane-dense (128-padded) bf16 weights; f32 biases.
    conv_prepped = []
    for wflat, b in params["conv"]:
        cout = wflat.shape[1]
        cp = _ceil_mult(cout, LANE)
        conv_prepped.append((_pad_lanes(wflat, cp).astype(jnp.bfloat16),
                             _pad_lanes(b, cp).astype(jnp.float32), cout))
    lin_ws, lin_bs = [], []
    for w, b in params["linear"]:
        din, dout = w.shape
        rp, cp = _ceil_mult(din, LANE), _ceil_mult(dout, LANE)
        lin_ws.append(jnp.pad(w, ((0, rp - din), (0, cp - dout))).astype(jnp.bfloat16))
        lin_bs.append(_pad_lanes(b, cp).astype(jnp.float32))

    # Leading conv stages: gridded fused conv+ReLU+pool kernel.
    n_conv = len(kernel_sizes)
    for i in range(n_conv - 1):
        wp, bp, cout = conv_prepped[i]
        x = conv_relu_pool(x, wp, bp, cout,
                           kernel_sizes[i], strides[i], pooling_sizes[i])

    # Last conv stage + CenterCrop(1) + MLP fused in one kernel.
    wp, bp, _ = conv_prepped[-1]
    out = conv_tail_mlp(x, wp, bp, kernel_sizes[-1], strides[-1],
                        pooling_sizes[-1], lin_ws, lin_bs)
    # TODO(synk): PyTorch .squeeze() would also drop the batch dim when N == 1;
    # this path always returns (N, target_size).
    return out[:, :target_size]


# ---------------------------------------------------------------------------
# Pure-JAX f32 reference for correctness checking
# ---------------------------------------------------------------------------
def reference_forward(x_nchw, params, kernel_sizes, strides, pooling_sizes, in_channels):
    x = jnp.transpose(x_nchw, (0, 2, 3, 1))
    cin = in_channels
    for (wflat, b), k, s, p in zip(params["conv"], kernel_sizes, strides, pooling_sizes):
        w = wflat.reshape(k, k, cin, -1)                         # HWIO
        y = jax.lax.conv_general_dilated(
            x, w, window_strides=(s, s), padding="VALID",
            dimension_numbers=("NHWC", "HWIO", "NHWC"))
        y = jnp.maximum(y + b.reshape(1, 1, 1, -1), 0.0)
        y = jax.lax.reduce_window(y, -jnp.inf, jax.lax.max,
                                  (1, p, p, 1), (1, p, p, 1), "VALID")
        x = y
        cin = w.shape[-1]
    N, Hf, Wf, _ = x.shape
    ch = int(round((Hf - 1) / 2.0))
    cw = int(round((Wf - 1) / 2.0))
    h = x[:, ch, cw, :]
    for w, b in params["linear"]:
        h = jnp.maximum(h @ w + b, 0.0)
    return h


if __name__ == "__main__":
    in_channels = 4
    out_channels = 32
    kernel_sizes = (3, 3)
    strides = (1, 1)
    pooling_sizes = (2, 2)
    n_linear_layers = 2
    target_size = 8

    key = jax.random.PRNGKey(0)
    key, xk = jax.random.split(key)
    x = jax.random.normal(xk, (2, in_channels, 16, 16), jnp.float32)  # NCHW input

    params = init_params(key, in_channels, out_channels, kernel_sizes,
                         n_linear_layers, target_size)

    out = spatial_block_forward(x, params, kernel_sizes, strides, pooling_sizes,
                                target_size)
    out = jax.block_until_ready(out)

    ref = reference_forward(x, params, kernel_sizes, strides, pooling_sizes,
                            in_channels)
    assert out.shape == (2, target_size), out.shape
    # bf16 MXU operands (f32 accumulation) -> looser tolerance than pure f32.
    assert jnp.allclose(out, ref, atol=5e-2, rtol=5e-2), (out, ref)
    print("KERNEL_OK")
</pallas_src>

<mosaic_0001>
module attributes {stable_mosaic.version = 11 : i64} {
  func.func @kernel(%arg0: i32, %arg1: memref<448x36xbf16, #tpu.memory_space<vmem>>, %arg2: memref<36x128xbf16, #tpu.memory_space<vmem>>, %arg3: memref<1x128xf32, #tpu.memory_space<vmem>>, %arg4: memref<112x128xbf16, #tpu.memory_space<vmem>>) attributes {dimension_semantics = [#tpu.dimension_semantics<parallel>], iteration_bounds = array<i64: 1>, scalar_prefetch = 0 : i64, scratch_operands = 0 : i64, tpu.core_type = #tpu.core_type<tc>, window_params = [{transform_indices = @transform_0, window_bounds = array<i64: 448, 36>}, {pipeline_mode = #tpu.pipeline_mode<synchronous>, transform_indices = @transform_1, window_bounds = array<i64: 36, 128>}, {pipeline_mode = #tpu.pipeline_mode<synchronous>, transform_indices = @transform_2, window_bounds = array<i64: 1, 128>}, {transform_indices = @transform_3, window_bounds = array<i64: 112, 128>}]} {
    %c0 = arith.constant 0 : index
    %c0_0 = arith.constant 0 : index
    %0 = vector.load %arg1[%c0, %c0_0] : memref<448x36xbf16, #tpu.memory_space<vmem>>, vector<448x36xbf16>
    %c0_1 = arith.constant 0 : index
    %c0_2 = arith.constant 0 : index
    %1 = vector.load %arg2[%c0_1, %c0_2] : memref<36x128xbf16, #tpu.memory_space<vmem>>, vector<36x128xbf16>
    %cst = arith.constant dense<0.000000e+00> : vector<448x128xf32>
    %2 = tpu.matmul %0, %1, %cst {dimension_numbers = #tpu.dot_dimension_numbers<[1], [0], [0], [1], [0, 0, 1, 1], [], []>} : vector<448x36xbf16>, vector<36x128xbf16>, vector<448x128xf32> -> vector<448x128xf32>
    %3 = vector.extract_strided_slice %2 {offsets = [0, 0], sizes = [112, 128], strides = [1, 1]} : vector<448x128xf32> to vector<112x128xf32>
    %4 = vector.extract_strided_slice %2 {offsets = [112, 0], sizes = [112, 128], strides = [1, 1]} : vector<448x128xf32> to vector<112x128xf32>
    %5 = arith.maximumf %3, %4 : vector<112x128xf32>
    %6 = vector.extract_strided_slice %2 {offsets = [224, 0], sizes = [112, 128], strides = [1, 1]} : vector<448x128xf32> to vector<112x128xf32>
    %7 = arith.maximumf %5, %6 : vector<112x128xf32>
    %8 = vector.extract_strided_slice %2 {offsets = [336, 0], sizes = [112, 128], strides = [1, 1]} : vector<448x128xf32> to vector<112x128xf32>
    %9 = arith.maximumf %7, %8 : vector<112x128xf32>
    %c0_3 = arith.constant 0 : index
    %c0_4 = arith.constant 0 : index
    %10 = vector.load %arg3[%c0_3, %c0_4] : memref<1x128xf32, #tpu.memory_space<vmem>>, vector<1x128xf32>
    %11 = vector.broadcast %10 : vector<1x128xf32> to vector<112x128xf32>
    %12 = arith.addf %9, %11 : vector<112x128xf32>
    %cst_5 = arith.constant 0.000000e+00 : f32
    %13 = vector.broadcast %cst_5 : f32 to vector<112x128xf32>
    %14 = arith.maximumf %12, %13 : vector<112x128xf32>
    %15 = arith.truncf %14 : vector<112x128xf32> to vector<112x128xbf16>
    %c0_6 = arith.constant 0 : index
    %c0_7 = arith.constant 0 : index
    %16 = vector.load %arg4[%c0_6, %c0_7] : memref<112x128xbf16, #tpu.memory_space<vmem>>, vector<112x128xbf16>
    tpu.vector_store %arg4[%c0_6, %c0_7], %15 {strides = array<i32>} : memref<112x128xbf16, #tpu.memory_space<vmem>>, vector<112x128xbf16>,
    return
  }
  func.func @transform_0(%arg0: i32) -> (i32, i32) {
    %c0_i32 = arith.constant 0 : i32
    %c0_i32_0 = arith.constant 0 : i32
    return %arg0, %c0_i32 : i32, i32
  }
  func.func @transform_1(%arg0: i32) -> (i32, i32) {
    %c0_i32 = arith.constant 0 : i32
    %c0_i32_0 = arith.constant 0 : i32
    %c0_i32_1 = arith.constant 0 : i32
    return %c0_i32, %c0_i32_0 : i32, i32
  }
  func.func @transform_2(%arg0: i32) -> (i32, i32) {
    %c0_i32 = arith.constant 0 : i32
    %c0_i32_0 = arith.constant 0 : i32
    %c0_i32_1 = arith.constant 0 : i32
    return %c0_i32, %c0_i32_0 : i32, i32
  }
  func.func @transform_3(%arg0: i32) -> (i32, i32) {
    %c0_i32 = arith.constant 0 : i32
    %c0_i32_0 = arith.constant 0 : i32
    return %arg0, %c0_i32 : i32, i32
  }
}

</mosaic_0001>

<llo_original>
// kernel: tpu_custom_call.1
$region0: #{tpu_custom_call.1}
  #allocation0 [shape = 'u32[]', space=smem, size = 0x4, offset = 0x4, fixed_abs, tag = 'smem constant byte address 0x4 - core index']
  #allocation1 [shape = 'u32[144,128]{1,0:T(1,128)}', space=vmem, size = 0x12000, scoped, tag = 'internal scratch']
  %s0 = inlined_call_operand.vmem [shape: bf16[448,36], index: 0, kind: input, shape index: {}]
  %s1 = inlined_call_operand.vmem [shape: bf16[36,128], index: 1, kind: input, shape index: {}]
  %s2 = inlined_call_operand.vmem [shape: f32[1,128], index: 2, kind: input, shape index: {}]
  %s3 = inlined_call_operand.hbm [shape: bf16[112,128], index: 3, kind: output, shape index: {}]
  %s4 = sld [smem:[#allocation0]]
  $region22: #{tpu_custom_call.1} parent=0
    _
  %s6 = ssub.s32 1, %s4
  %s7 = scalar_select 0, %s6, %s4
  $region1: #{tpu_custom_call.1} parent=0
    #allocation2 [shape = 'u8[28672]{0}', space=vmem, size = 0x7000, scoped, tag = 'output window, operand 0, single buffered']
    #allocation3 [shape = 's32[1]{0}', space=sflag, size = 0x4, scoped, tag = 'scoped memory for tpu_custom_call.1']
    %8 = vsyncpa [#allocation3], 0
    // Predicated region
    $region2: #{tpu_custom_call.1} parent=1 // pred_check
      _
    $region3: #{tpu_custom_call.1} parent=1 // pred_check_branch
      %10 = sbr.rel (0) target = $region5
    $region4: #{tpu_custom_call.1} parent=1 // pred_region
      _
    $region5: #{tpu_custom_call.1} parent=1 // pred_fallthru
      _
    // Predicated region
    $region6: #{tpu_custom_call.1} parent=1 // pred_check
      _
    $region7: #{tpu_custom_call.1} parent=1 // pred_check_branch
      %12 = sbr.rel (0) target = $region9
    $region8: #{tpu_custom_call.1} parent=1 // pred_region
      _
    $region9: #{tpu_custom_call.1} parent=1 // pred_fallthru
      _
    // Predicated region
    $region10: #{tpu_custom_call.1} parent=1 // pred_check
      _
    $region11: #{tpu_custom_call.1} parent=1 // pred_check_branch
      %14 = sbr.rel (0) target = $region13
    $region12: #{tpu_custom_call.1} parent=1 // pred_region
      _
    $region13: #{tpu_custom_call.1} parent=1 // pred_fallthru
      _
    %v16 = vld [vmem:[%s0] sm:$0xf]
    %v17 = vld [vmem:[%s0 + $0x4] sm:$0xf]
    %v18 = vld [vmem:[%s0 + $0x8] sm:$0xf]
    %v19 = vld [vmem:[%s0 + $0xc] sm:$0xf]
    %v20 = vld [vmem:[%s0 + $0x10] sm:$0xf]
    %v21 = vld [vmem:[%s0 + $0x14] sm:$0xf]
    %v22 = vld [vmem:[%s0 + $0x18] sm:$0xf]
    %v23 = vld [vmem:[%s0 + $0x1c] sm:$0xf]
    %v24 = vld [vmem:[%s0 + $0x20] sm:$0xf]
    %v25 = vld [vmem:[%s0 + $0x24] sm:$0xf]
    %v26 = vld [vmem:[%s0 + $0x28] sm:$0xf]
    %v27 = vld [vmem:[%s0 + $0x2c] sm:$0xf]
    %v28 = vld [vmem:[%s0 + $0x30] sm:$0xf]
    %v29 = vld [vmem:[%s0 + $0x34] sm:$0xf]
    %v30 = vld [vmem:[%s0 + $0x38] sm:$0xf]
    %v31 = vld [vmem:[%s0 + $0x3c] sm:$0xf]
    %v32 = vld [vmem:[%s0 + $0x40] sm:$0xf]
    %v33 = vld [vmem:[%s0 + $0x44] sm:$0xf]
    %v34 = vld [vmem:[%s0 + $0x48] sm:$0xf]
    %v35 = vld [vmem:[%s0 + $0x4c] sm:$0xf]
    %v36 = vld [vmem:[%s0 + $0x50] sm:$0xf]
    %v37 = vld [vmem:[%s0 + $0x54] sm:$0xf]
    %v38 = vld [vmem:[%s0 + $0x58] sm:$0xf]
    %v39 = vld [vmem:[%s0 + $0x5c] sm:$0xf]
    %v40 = vld [vmem:[%s0 + $0x60] sm:$0xf]
    %v41 = vld [vmem:[%s0 + $0x64] sm:$0xf]
    %v42 = vld [vmem:[%s0 + $0x68] sm:$0xf]
    %v43 = vld [vmem:[%s0 + $0x6c] sm:$0xf]
    %v44 = vld [vmem:[%s0 + $0x70] sm:$0xf]
    %v45 = vld [vmem:[%s0 + $0x74] sm:$0xf]
    %v46 = vld [vmem:[%s0 + $0x78] sm:$0xf]
    %v47 = vld [vmem:[%s0 + $0x7c] sm:$0xf]
    %v48 = vld [vmem:[%s0 + $0x80] sm:$0xf]
    %v49 = vld [vmem:[%s0 + $0x84] sm:$0xf]
    %v50 = vld [vmem:[%s0 + $0x88] sm:$0xf]
    %v51 = vld [vmem:[%s0 + $0x8c] sm:$0xf]
    %v52 = vld [vmem:[%s0 + $0x90] sm:$0xf]
    %v53 = vld [vmem:[%s0 + $0x94] sm:$0xf]
    %v54 = vld [vmem:[%s0 + $0x98] sm:$0xf]
    %v55 = vld [vmem:[%s0 + $0x9c] sm:$0xf]
    %v56 = vld [vmem:[%s0 + $0xa0] sm:$0xf]
    %v57 = vld [vmem:[%s0 + $0xa4] sm:$0xf]
    %v58 = vld [vmem:[%s0 + $0xa8] sm:$0xf]
    %v59 = vld [vmem:[%s0 + $0xac] sm:$0xf]
    %v60 = vld [vmem:[%s0 + $0xb0] sm:$0xf]
    %v61 = vld [vmem:[%s0 + $0xb4] sm:$0xf]
    %v62 = vld [vmem:[%s0 + $0xb8] sm:$0xf]
    %v63 = vld [vmem:[%s0 + $0xbc] sm:$0xf]
    %v64 = vld [vmem:[%s0 + $0xc0] sm:$0xf]
    %v65 = vld [vmem:[%s0 + $0xc4] sm:$0xf]
    %v66 = vld [vmem:[%s0 + $0xc8] sm:$0xf]
    %v67 = vld [vmem:[%s0 + $0xcc] sm:$0xf]
    %v68 = vld [vmem:[%s0 + $0xd0] sm:$0xf]
    %v69 = vld [vmem:[%s0 + $0xd4] sm:$0xf]
    %v70 = vld [vmem:[%s0 + $0xd8] sm:$0xf]
    %v71 = vld [vmem:[%s0 + $0xdc] sm:$0xf]
    %v72 = vld [vmem:[%s1] sm:$0xf]
    %v73 = vld [vmem:[%s1 + $0x4] sm:$0xf]
    %v74 = vld [vmem:[%s1 + $0x8] sm:$0xf]
    %v75 = vld [vmem:[%s1 + $0xc] sm:$0xf]
    %v76 = vld [vmem:[%s1 + $0x10] sm:$0x3]
    %v133 = vunpack.c.l.b16 %v16
    %v134 = vunpack.c.l.b16 %v17
    %v135 = vunpack.c.l.b16 %v18
    %v136 = vunpack.c.l.b16 %v19
    %v137 = vunpack.c.l.b16 %v20
    %v138 = vunpack.c.l.b16 %v21
    %v139 = vunpack.c.l.b16 %v22
    %v140 = vunpack.c.l.b16 %v23
    %v141 = vunpack.c.l.b16 %v24
    %v142 = vunpack.c.l.b16 %v25
    %v143 = vunpack.c.l.b16 %v26
    %v144 = vunpack.c.l.b16 %v27
    %v145 = vunpack.c.l.b16 %v28
    %v146 = vunpack.c.l.b16 %v29
    %v147 = vunpack.c.l.b16 %v30
    %v148 = vunpack.c.l.b16 %v31
    %v149 = vunpack.c.l.b16 %v32
    %v150 = vunpack.c.l.b16 %v33
    %v151 = vunpack.c.l.b16 %v34
    %v152 = vunpack.c.l.b16 %v35
    %v153 = vunpack.c.l.b16 %v36
    %v154 = vunpack.c.l.b16 %v37
    %v155 = vunpack.c.l.b16 %v38
    %v156 = vunpack.c.l.b16 %v39
    %v157 = vunpack.c.l.b16 %v40
    %v158 = vunpack.c.l.b16 %v41
    %v159 = vunpack.c.l.b16 %v42
    %v160 = vunpack.c.l.b16 %v43
    %v161 = vunpack.c.l.b16 %v44
    %v162 = vunpack.c.l.b16 %v45
    %v163 = vunpack.c.l.b16 %v46
    %v164 = vunpack.c.l.b16 %v47
    %v165 = vunpack.c.l.b16 %v48
    %v166 = vunpack.c.l.b16 %v49
    %v167 = vunpack.c.l.b16 %v50
    %v168 = vunpack.c.l.b16 %v51
    %v169 = vunpack.c.l.b16 %v52
    %v170 = vunpack.c.l.b16 %v53
    %v171 = vunpack.c.l.b16 %v54
    %v172 = vunpack.c.l.b16 %v55
    %v173 = vunpack.c.l.b16 %v56
    %v174 = vunpack.c.l.b16 %v57
    %v175 = vunpack.c.l.b16 %v58
    %v176 = vunpack.c.l.b16 %v59
    %v177 = vunpack.c.l.b16 %v60
    %v178 = vunpack.c.l.b16 %v61
    %v179 = vunpack.c.l.b16 %v62
    %v180 = vunpack.c.l.b16 %v63
    %v181 = vunpack.c.l.b16 %v64
    %v182 = vunpack.c.l.b16 %v65
    %v183 = vunpack.c.l.b16 %v66
    %v184 = vunpack.c.l.b16 %v67
    %v185 = vunpack.c.l.b16 %v68
    %v186 = vunpack.c.l.b16 %v69
    %v187 = vunpack.c.l.b16 %v70
    %v188 = vunpack.c.l.b16 %v71
    %v189 = vpack.c.b16 %v134, %v133
    %v190 = vpack.c.b16 %v136, %v135
    %v191 = vpack.c.b16 %v138, %v137
    %v192 = vpack.c.b16 %v140, %v139
    %v193 = vpack.c.b16 %v142, %v141
    %v194 = vpack.c.b16 %v144, %v143
    %v195 = vpack.c.b16 %v146, %v145
    %v196 = vpack.c.b16 %v148, %v147
    %v197 = vpack.c.b16 %v150, %v149
    %v198 = vpack.c.b16 %v152, %v151
    %v199 = vpack.c.b16 %v154, %v153
    %v200 = vpack.c.b16 %v156, %v155
    %v201 = vpack.c.b16 %v158, %v157
    %v202 = vpack.c.b16 %v160, %v159
    %v203 = vpack.c.b16 %v162, %v161
    %v204 = vpack.c.b16 %v164, %v163
    %v205 = vpack.c.b16 %v166, %v165
    %v206 = vpack.c.b16 %v168, %v167
    %v207 = vpack.c.b16 %v170, %v169
    %v208 = vpack.c.b16 %v172, %v171
    %v209 = vpack.c.b16 %v174, %v173
    %v210 = vpack.c.b16 %v176, %v175
    %v211 = vpack.c.b16 %v178, %v177
    %v212 = vpack.c.b16 %v180, %v179
    %v213 = vpack.c.b16 %v182, %v181
    %v214 = vpack.c.b16 %v184, %v183
    %v215 = vpack.c.b16 %v186, %v185
    %v216 = vpack.c.b16 %v188, %v187
    %v222 = vunpack.c.l.b16 %v72
    %v223 = vunpack.c.l.b16 %v73
    %v224 = vunpack.c.l.b16 %v74
    %v225 = vunpack.c.l.b16 %v75
    %v226 = vunpack.c.l.b16 %v76
    %v227 = vpack.c.b16 %v223, %v222
    %v228 = vpack.c.b16 %v225, %v224
    %v229 = vpack.c.b16 %v226, %v226
    %vm232 = vcmask 293888
    %v234 = vsel %vm232, %v189, 0
    %v237 = vsel %vm232, %v190, 0
    %v240 = vsel %vm232, %v191, 0
    %v243 = vsel %vm232, %v192, 0
    %v246 = vsel %vm232, %v193, 0
    %v249 = vsel %vm232, %v194, 0
    %v252 = vsel %vm232, %v195, 0
    %v255 = vsel %vm232, %v196, 0
    %v258 = vsel %vm232, %v197, 0
    %v261 = vsel %vm232, %v198, 0
    %v264 = vsel %vm232, %v199, 0
    %v267 = vsel %vm232, %v200, 0
    %v270 = vsel %vm232, %v201, 0
    %v273 = vsel %vm232, %v202, 0
    %v276 = vsel %vm232, %v203, 0
    %v279 = vsel %vm232, %v204, 0
    %v282 = vsel %vm232, %v205, 0
    %v285 = vsel %vm232, %v206, 0
    %v288 = vsel %vm232, %v207, 0
    %v291 = vsel %vm232, %v208, 0
    %v294 = vsel %vm232, %v209, 0
    %v297 = vsel %vm232, %v210, 0
    %v300 = vsel %vm232, %v211, 0
    %v303 = vsel %vm232, %v212, 0
    %v306 = vsel %vm232, %v213, 0
    %v309 = vsel %vm232, %v214, 0
    %v312 = vsel %vm232, %v215, 0
    %v315 = vsel %vm232, %v216, 0
    %vm317 = vcmask 1041408
    %v319 = vsel %vm317, %v229, 0
    %321 = vmatprep.subr.bf16.mxu0 0
    %322 = vmatpush1.bf16.msra.mxu0 0
    %323 = vmatprep.subr.bf16.mxu0 0
    %324 = vmatpush1.bf16.msra.mxu0 0
    %325 = vmatprep.subr.bf16.mxu0 0
    %326 = vmatpush1.bf16.msra.mxu0 0
    %327 = vmatprep.subr.bf16.mxu0 0
    %328 = vmatpush1.bf16.msra.mxu0 0
    %329 = vmatprep.subr.bf16.mxu0 0
    %330 = vmatpush1.bf16.msra.mxu0 0
    %331 = vmatprep.subr.bf16.mxu0 0
    %332 = vmatpush1.bf16.msra.mxu0 %v319
    %333 = vmatprep.subr.bf16.mxu0 0
    %334 = vmatpush1.bf16.msra.mxu0 %v228
    %335 = vmatprep.subr.bf16.mxu0 0
    %336 = vmatpush1.bf16.msra.mxu0 %v227
    %337 = vmatprep.subr.bf16.mxu0 0
    %338 = vmatpush2.bf16.msra.mxu0 0
    %339 = vmatprep.subr.bf16.mxu0 0
    %340 = vmatpush2.bf16.msra.mxu0 0
    %341 = vmatprep.subr.bf16.mxu0 0
    %342 = vmatpush2.bf16.msra.mxu0 0
    %343 = vmatprep.subr.bf16.mxu0 0
    %344 = vmatpush2.bf16.msra.mxu0 0
    %345 = vmatprep.subr.bf16.mxu0 0
    %346 = vmatpush2.bf16.msra.mxu0 0
    %347 = vmatprep.subr.bf16.mxu0 0
    %348 = vmatpush2.bf16.msra.mxu0 0
    %349 = vmatprep.subr.bf16.mxu0 0
    %350 = vmatpush2.bf16.msra.mxu0 0
    %351 = vmatprep.subr.bf16.mxu0 0
    %352 = vmatpush2.bf16.msra.mxu0 0
    %353 = vmatprep.mubr.bf16.mxu0 0
    %354 = vmatmul.mubr.bf16.gmra.mxu0 %v234
    %v355 = vpop.f32.mrf.mxu0
    %v356 = vadd.f32 0.0, %v355
    %v357 = vpop.f32.mrf.mxu0
    %v358 = vpop.f32.mrf.mxu0
    %v359 = vadd.f32 0.0, %v358
    %v360 = vpop.f32.mrf.mxu0
    %361 = vmatprep.mubr.bf16.mxu0 0
    %362 = vmatmul.mubr.bf16.gmra.mxu0 %v237
    %v363 = vpop.f32.mrf.mxu0
    %v364 = vadd.f32 0.0, %v363
    %v365 = vpop.f32.mrf.mxu0
    %v366 = vpop.f32.mrf.mxu0
    %v367 = vadd.f32 0.0, %v366
    %v368 = vpop.f32.mrf.mxu0
    %369 = vmatprep.mubr.bf16.mxu0 0
    %370 = vmatmul.mubr.bf16.gmra.mxu0 %v240
    %v371 = vpop.f32.mrf.mxu0
    %v372 = vadd.f32 0.0, %v371
    %v373 = vpop.f32.mrf.mxu0
    %v374 = vpop.f32.mrf.mxu0
    %v375 = vadd.f32 0.0, %v374
    %v376 = vpop.f32.mrf.mxu0
    %377 = vmatprep.mubr.bf16.mxu0 0
    %378 = vmatmul.mubr.bf16.gmra.mxu0 %v243
    %v379 = vpop.f32.mrf.mxu0
    %v380 = vadd.f32 0.0, %v379
    %v381 = vpop.f32.mrf.mxu0
    %v382 = vpop.f32.mrf.mxu0
    %v383 = vadd.f32 0.0, %v382
    %v384 = vpop.f32.mrf.mxu0
    %385 = vmatprep.mubr.bf16.mxu0 0
    %386 = vmatmul.mubr.bf16.gmra.mxu0 %v246
    %v387 = vpop.f32.mrf.mxu0
    %v388 = vadd.f32 0.0, %v387
    %v389 = vpop.f32.mrf.mxu0
    %v390 = vpop.f32.mrf.mxu0
    %v391 = vadd.f32 0.0, %v390
    %v392 = vpop.f32.mrf.mxu0
    %393 = vmatprep.mubr.bf16.mxu0 0
    %394 = vmatmul.mubr.bf16.gmra.mxu0 %v249
    %v395 = vpop.f32.mrf.mxu0
    %v396 = vadd.f32 0.0, %v395
    %v397 = vpop.f32.mrf.mxu0
    %v398 = vpop.f32.mrf.mxu0
    %v399 = vadd.f32 0.0, %v398
    %v400 = vpop.f32.mrf.mxu0
    %401 = vmatprep.mubr.bf16.mxu0 0
    %402 = vmatmul.mubr.bf16.gmra.mxu0 %v252
    %v403 = vpop.f32.mrf.mxu0
    %v404 = vadd.f32 0.0, %v403
    %v405 = vpop.f32.mrf.mxu0
    %v406 = vpop.f32.mrf.mxu0
    %v407 = vadd.f32 0.0, %v406
    %v408 = vpop.f32.mrf.mxu0
    %409 = vmatprep.mubr.bf16.mxu0 0
    %410 = vmatmul.mubr.bf16.gmra.mxu0 %v255
    %v411 = vpop.f32.mrf.mxu0
    %v412 = vadd.f32 0.0, %v411
    %v413 = vpop.f32.mrf.mxu0
    %v414 = vpop.f32.mrf.mxu0
    %v415 = vadd.f32 0.0, %v414
    %v416 = vpop.f32.mrf.mxu0
    %417 = vmatprep.mubr.bf16.mxu0 0
    %418 = vmatmul.mubr.bf16.gmra.mxu0 %v258
    %v419 = vpop.f32.mrf.mxu0
    %v420 = vadd.f32 0.0, %v419
    %v421 = vpop.f32.mrf.mxu0
    %v422 = vpop.f32.mrf.mxu0
    %v423 = vadd.f32 0.0, %v422
    %v424 = vpop.f32.mrf.mxu0
    %425 = vmatprep.mubr.bf16.mxu0 0
    %426 = vmatmul.mubr.bf16.gmra.mxu0 %v261
    %v427 = vpop.f32.mrf.mxu0
    %v428 = vadd.f32 0.0, %v427
    %v429 = vpop.f32.mrf.mxu0
    %v430 = vpop.f32.mrf.mxu0
    %v431 = vadd.f32 0.0, %v430
    %v432 = vpop.f32.mrf.mxu0
    %433 = vmatprep.mubr.bf16.mxu0 0
    %434 = vmatmul.mubr.bf16.gmra.mxu0 %v264
    %v435 = vpop.f32.mrf.mxu0
    %v436 = vadd.f32 0.0, %v435
    %v437 = vpop.f32.mrf.mxu0
    %v438 = vpop.f32.mrf.mxu0
    %v439 = vadd.f32 0.0, %v438
    %v440 = vpop.f32.mrf.mxu0
    %441 = vmatprep.mubr.bf16.mxu0 0
    %442 = vmatmul.mubr.bf16.gmra.mxu0 %v267
    %v443 = vpop.f32.mrf.mxu0
    %v444 = vadd.f32 0.0, %v443
    %v445 = vpop.f32.mrf.mxu0
    %v446 = vpop.f32.mrf.mxu0
    %v447 = vadd.f32 0.0, %v446
    %v448 = vpop.f32.mrf.mxu0
    %449 = vmatprep.mubr.bf16.mxu0 0
    %450 = vmatmul.mubr.bf16.gmra.mxu0 %v270
    %v451 = vpop.f32.mrf.mxu0
    %v452 = vadd.f32 0.0, %v451
    %v453 = vpop.f32.mrf.mxu0
    %v454 = vpop.f32.mrf.mxu0
    %v455 = vadd.f32 0.0, %v454
    %v456 = vpop.f32.mrf.mxu0
    %457 = vmatprep.mubr.bf16.mxu0 0
    %458 = vmatmul.mubr.bf16.gmra.mxu0 %v273
    %v459 = vpop.f32.mrf.mxu0
    %v460 = vadd.f32 0.0, %v459
    %v461 = vpop.f32.mrf.mxu0
    %v462 = vpop.f32.mrf.mxu0
    %v463 = vadd.f32 0.0, %v462
    %v464 = vpop.f32.mrf.mxu0
    %465 = vmatprep.mubr.bf16.mxu0 0
    %466 = vmatmul.mubr.bf16.gmra.mxu0 %v276
    %v467 = vpop.f32.mrf.mxu0
    %v468 = vadd.f32 0.0, %v467
    %v469 = vpop.f32.mrf.mxu0
    %v470 = vpop.f32.mrf.mxu0
    %v471 = vadd.f32 0.0, %v470
    %v472 = vpop.f32.mrf.mxu0
    %473 = vmatprep.mubr.bf16.mxu0 0
    %474 = vmatmul.mubr.bf16.gmra.mxu0 %v279
    %v475 = vpop.f32.mrf.mxu0
    %v476 = vadd.f32 0.0, %v475
    %v477 = vpop.f32.mrf.mxu0
    %v478 = vpop.f32.mrf.mxu0
    %v479 = vadd.f32 0.0, %v478
    %v480 = vpop.f32.mrf.mxu0
    %481 = vmatprep.mubr.bf16.mxu0 0
    %482 = vmatmul.mubr.bf16.gmra.mxu0 %v282
    %v483 = vpop.f32.mrf.mxu0
    %v484 = vadd.f32 0.0, %v483
    %v485 = vpop.f32.mrf.mxu0
    %v486 = vpop.f32.mrf.mxu0
    %v487 = vadd.f32 0.0, %v486
    %v488 = vpop.f32.mrf.mxu0
    %489 = vmatprep.mubr.bf16.mxu0 0
    %490 = vmatmul.mubr.bf16.gmra.mxu0 %v285
    %v491 = vpop.f32.mrf.mxu0
    %v492 = vadd.f32 0.0, %v491
    %v493 = vpop.f32.mrf.mxu0
    %v494 = vpop.f32.mrf.mxu0
    %v495 = vadd.f32 0.0, %v494
    %v496 = vpop.f32.mrf.mxu0
    %497 = vmatprep.mubr.bf16.mxu0 0
    %498 = vmatmul.mubr.bf16.gmra.mxu0 %v288
    %v499 = vpop.f32.mrf.mxu0
    %v500 = vadd.f32 0.0, %v499
    %v501 = vpop.f32.mrf.mxu0
    %v502 = vpop.f32.mrf.mxu0
    %v503 = vadd.f32 0.0, %v502
    %v504 = vpop.f32.mrf.mxu0
    %505 = vmatprep.mubr.bf16.mxu0 0
    %506 = vmatmul.mubr.bf16.gmra.mxu0 %v291
    %v507 = vpop.f32.mrf.mxu0
    %v508 = vadd.f32 0.0, %v507
    %v509 = vpop.f32.mrf.mxu0
    %v510 = vpop.f32.mrf.mxu0
    %v511 = vadd.f32 0.0, %v510
    %v512 = vpop.f32.mrf.mxu0
    %513 = vmatprep.mubr.bf16.mxu0 0
    %514 = vmatmul.mubr.bf16.gmra.mxu0 %v294
    %v515 = vpop.f32.mrf.mxu0
    %v516 = vadd.f32 0.0, %v515
    %v517 = vpop.f32.mrf.mxu0
    %v518 = vpop.f32.mrf.mxu0
    %v519 = vadd.f32 0.0, %v518
    %v520 = vpop.f32.mrf.mxu0
    %521 = vmatprep.mubr.bf16.mxu0 0
    %522 = vmatmul.mubr.bf16.gmra.mxu0 %v297
    %v523 = vpop.f32.mrf.mxu0
    %v524 = vadd.f32 0.0, %v523
    %v525 = vpop.f32.mrf.mxu0
    %v526 = vpop.f32.mrf.mxu0
    %v527 = vadd.f32 0.0, %v526
    %v528 = vpop.f32.mrf.mxu0
    %529 = vmatprep.mubr.bf16.mxu0 0
    %530 = vmatmul.mubr.bf16.gmra.mxu0 %v300
    %v531 = vpop.f32.mrf.mxu0
    %v532 = vadd.f32 0.0, %v531
    %v533 = vpop.f32.mrf.mxu0
    %v534 = vpop.f32.mrf.mxu0
    %v535 = vadd.f32 0.0, %v534
    %v536 = vpop.f32.mrf.mxu0
    %537 = vmatprep.mubr.bf16.mxu0 0
    %538 = vmatmul.mubr.bf16.gmra.mxu0 %v303
    %v539 = vpop.f32.mrf.mxu0
    %v540 = vadd.f32 0.0, %v539
    %v541 = vpop.f32.mrf.mxu0
    %v542 = vpop.f32.mrf.mxu0
    %v543 = vadd.f32 0.0, %v542
    %v544 = vpop.f32.mrf.mxu0
    %545 = vmatprep.mubr.bf16.mxu0 0
    %546 = vmatmul.mubr.bf16.gmra.mxu0 %v306
    %v547 = vpop.f32.mrf.mxu0
    %v548 = vadd.f32 0.0, %v547
    %v549 = vpop.f32.mrf.mxu0
    %v550 = vpop.f32.mrf.mxu0
    %v551 = vadd.f32 0.0, %v550
    %v552 = vpop.f32.mrf.mxu0
    %553 = vmatprep.mubr.bf16.mxu0 0
    %554 = vmatmul.mubr.bf16.gmra.mxu0 %v309
    %v555 = vpop.f32.mrf.mxu0
    %v556 = vadd.f32 0.0, %v555
    %v557 = vpop.f32.mrf.mxu0
    %v558 = vpop.f32.mrf.mxu0
    %v559 = vadd.f32 0.0, %v558
    %v560 = vpop.f32.mrf.mxu0
    %561 = vmatprep.mubr.bf16.mxu0 0
    %562 = vmatmul.mubr.bf16.gmra.mxu0 %v312
    %v563 = vpop.f32.mrf.mxu0
    %v564 = vadd.f32 0.0, %v563
    %v565 = vpop.f32.mrf.mxu0
    %v566 = vpop.f32.mrf.mxu0
    %v567 = vadd.f32 0.0, %v566
    %v568 = vpop.f32.mrf.mxu0
    %569 = vmatprep.mubr.bf16.mxu0 0
    %570 = vmatmul.mubr.bf16.gmra.mxu0 %v315
    %v571 = vpop.f32.mrf.mxu0
    %v572 = vadd.f32 0.0, %v571
    %v573 = vpop.f32.mrf.mxu0
    %v574 = vpop.f32.mrf.mxu0
    %v575 = vadd.f32 0.0, %v574
    %v576 = vpop.f32.mrf.mxu0
    %577 = vdwg.mxu0
    %v578 = vmax.f32 %v356, %v412
    %v579 = vmax.f32 %v359, %v415
    %v580 = vmax.f32 %v364, %v420
    %v581 = vmax.f32 %v367, %v423
    %v582 = vmax.f32 %v372, %v428
    %v583 = vmax.f32 %v375, %v431
    %v584 = vmax.f32 %v380, %v436
    %v585 = vmax.f32 %v383, %v439
    %v586 = vmax.f32 %v388, %v444
    %v587 = vmax.f32 %v391, %v447
    %v588 = vmax.f32 %v396, %v452
    %v589 = vmax.f32 %v399, %v455
    %v590 = vmax.f32 %v404, %v460
    %v591 = vmax.f32 %v407, %v463
    %v592 = vmax.f32 %v578, %v468
    %v593 = vmax.f32 %v579, %v471
    %v594 = vmax.f32 %v580, %v476
    %v595 = vmax.f32 %v581, %v479
    %v596 = vmax.f32 %v582, %v484
    %v597 = vmax.f32 %v583, %v487
    %v598 = vmax.f32 %v584, %v492
    %v599 = vmax.f32 %v585, %v495
    %v600 = vmax.f32 %v586, %v500
    %v601 = vmax.f32 %v587, %v503
    %v602 = vmax.f32 %v588, %v508
    %v603 = vmax.f32 %v589, %v511
    %v604 = vmax.f32 %v590, %v516
    %v605 = vmax.f32 %v591, %v519
    %v606 = vmax.f32 %v592, %v524
    %v607 = vmax.f32 %v593, %v527
    %v608 = vmax.f32 %v594, %v532
    %v609 = vmax.f32 %v595, %v535
    %v610 = vmax.f32 %v596, %v540
    %v611 = vmax.f32 %v597, %v543
    %v612 = vmax.f32 %v598, %v548
    %v613 = vmax.f32 %v599, %v551
    %v614 = vmax.f32 %v600, %v556
    %v615 = vmax.f32 %v601, %v559
    %v616 = vmax.f32 %v602, %v564
    %v617 = vmax.f32 %v603, %v567
    %v618 = vmax.f32 %v604, %v572
    %v619 = vmax.f32 %v605, %v575
    %v620 = vld [vmem:[%s2] sm:$0x1]
    %v622 = vlaneseq
    %v623 = vshrl.u32 %v622, 7
    %v624 = vsub.s32 0, %v623
    %v625 = vrot.slane %v620, %v624
    %v627 = vadd.f32 %v606, %v625
    %v628 = vadd.f32 %v607, %v625
    %v629 = vadd.f32 %v608, %v625
    %v630 = vadd.f32 %v609, %v625
    %v631 = vadd.f32 %v610, %v625
    %v632 = vadd.f32 %v611, %v625
    %v633 = vadd.f32 %v612, %v625
    %v634 = vadd.f32 %v613, %v625
    %v635 = vadd.f32 %v614, %v625
    %v636 = vadd.f32 %v615, %v625
    %v637 = vadd.f32 %v616, %v625
    %v638 = vadd.f32 %v617, %v625
    %v639 = vadd.f32 %v618, %v625
    %v640 = vadd.f32 %v619, %v625
    %v641 = vmax.f32 %v627, 0.0
    %v642 = vmax.f32 %v628, 0.0
    %v643 = vmax.f32 %v629, 0.0
    %v644 = vmax.f32 %v630, 0.0
    %v645 = vmax.f32 %v631, 0.0
    %v646 = vmax.f32 %v632, 0.0
    %v647 = vmax.f32 %v633, 0.0
    %v648 = vmax.f32 %v634, 0.0
    %v649 = vmax.f32 %v635, 0.0
    %v650 = vmax.f32 %v636, 0.0
    %v651 = vmax.f32 %v637, 0.0
    %v652 = vmax.f32 %v638, 0.0
    %v653 = vmax.f32 %v639, 0.0
    %v654 = vmax.f32 %v640, 0.0
    %v655 = vpack.c.bf16 %v642, %v641
    %v656 = vpack.c.bf16 %v644, %v643
    %v657 = vpack.c.bf16 %v646, %v645
    %v658 = vpack.c.bf16 %v648, %v647
    %v659 = vpack.c.bf16 %v650, %v649
    %v660 = vpack.c.bf16 %v652, %v651
    %v661 = vpack.c.bf16 %v654, %v653
    %v669 = vunpack.c.l.b16 %v655
    %v670 = vunpack.c.h.b16 %v655
    %v671 = vunpack.c.l.b16 %v656
    %v672 = vunpack.c.h.b16 %v656
    %v673 = vunpack.c.l.b16 %v657
    %v674 = vunpack.c.h.b16 %v657
    %v675 = vunpack.c.l.b16 %v658
    %v676 = vunpack.c.h.b16 %v658
    %v677 = vunpack.c.l.b16 %v659
    %v678 = vunpack.c.h.b16 %v659
    %v679 = vunpack.c.l.b16 %v660
    %v680 = vunpack.c.h.b16 %v660
    %v681 = vunpack.c.l.b16 %v661
    %v682 = vunpack.c.h.b16 %v661
    %v683 = vpack.c.b16 %v669, %v669
    %v684 = vpack.c.b16 %v670, %v670
    %v685 = vpack.c.b16 %v671, %v671
    %v686 = vpack.c.b16 %v672, %v672
    %v687 = vpack.c.b16 %v673, %v673
    %v688 = vpack.c.b16 %v674, %v674
    %v689 = vpack.c.b16 %v675, %v675
    %v690 = vpack.c.b16 %v676, %v676
    %v691 = vpack.c.b16 %v677, %v677
    %v692 = vpack.c.b16 %v678, %v678
    %v693 = vpack.c.b16 %v679, %v679
    %v694 = vpack.c.b16 %v680, %v680
    %v695 = vpack.c.b16 %v681, %v681
    %v696 = vpack.c.b16 %v682, %v682
    %711 = vst [vmem:[#allocation2] sm:$0xf] %v683
    %712 = vst [vmem:[#allocation2 + $0x4] sm:$0xf] %v684
    %713 = vst [vmem:[#allocation2 + $0x8] sm:$0xf] %v685
    %714 = vst [vmem:[#allocation2 + $0xc] sm:$0xf] %v686
    %715 = vst [vmem:[#allocation2 + $0x10] sm:$0xf] %v687
    %716 = vst [vmem:[#allocation2 + $0x14] sm:$0xf] %v688
    %717 = vst [vmem:[#allocation2 + $0x18] sm:$0xf] %v689
    %718 = vst [vmem:[#allocation2 + $0x1c] sm:$0xf] %v690
    %719 = vst [vmem:[#allocation2 + $0x20] sm:$0xf] %v691
    %720 = vst [vmem:[#allocation2 + $0x24] sm:$0xf] %v692
    %721 = vst [vmem:[#allocation2 + $0x28] sm:$0xf] %v693
    %722 = vst [vmem:[#allocation2 + $0x2c] sm:$0xf] %v694
    %723 = vst [vmem:[#allocation2 + $0x30] sm:$0xf] %v695
    %724 = vst [vmem:[#allocation2 + $0x34] sm:$0xf] %v696
    // Predicated region
    $region14: #{tpu_custom_call.1} parent=1 // pred_check
      _
    $region15: #{tpu_custom_call.1} parent=1 // pred_check_branch
      %726 = sbr.rel (0) target = $region17
    $region16: #{tpu_custom_call.1} parent=1 // pred_region
      %s728 = ssub.s32 896, 896
      %729 = vsyncadd [#allocation3], %s728
      %s730 = sshll.u32 [#allocation2], 4
      %s731 = int_to_ptr.vmem [resolvable:$true] %s730
      %736 = dma.vmem_to_hbm [thread:$0]  %s731, 896, %s3, [#allocation3], 64, 64, 4
    $region17: #{tpu_custom_call.1} parent=1 // pred_fallthru
      _
    // Predicated region
    $region18: #{tpu_custom_call.1} parent=1 // pred_check
      _
    $region19: #{tpu_custom_call.1} parent=1 // pred_check_branch
      %738 = sbr.rel (0) target = $region21
    $region20: #{tpu_custom_call.1} parent=1 // pred_region
      %739 = dma.done [#allocation3], 896
    $region21: #{tpu_custom_call.1} parent=1 // pred_fallthru
      _
    %740 = vsyncpa [#allocation3], 1

</llo_original>
